<compile_context>
chip_gen: v7x
topology: tpu7x:2x2x1
jax: 0.10.0
libtpu: 0.0.40
codegen_flags: <defaults>
</compile_context>

<pallas_src>
import functools

import numpy as np
import jax
import jax.numpy as jnp
from jax.experimental import pallas as pl
from jax.experimental.pallas import tpu as pltpu

COST_CLASS = 1.0
COST_MASK = 1.0
COST_DICE = 1.0
ALPHA = 0.25
GAMMA = 2.0          # static == 2 -> lowered to explicit multiplies in the kernel
NUM_TGT = 6          # tgt_ids = arange(1, 7) -> 6 target classes
NT_PAD = 8           # 6 target classes + ones row (free rowsum lane) + zeros pad row


# ----------------------------- Pallas kernel ------------------------------ #
def _cost_kernel(logits_ref, mask_ref, tgt_ref, tsum_ref, out_ref,
                 acc_fp, acc_fn, acc_p, *, hw):
    k = pl.program_id(1)

    @pl.when(k == 0)
    def _():
        acc_fp[...] = jnp.zeros_like(acc_fp)
        acc_fn[...] = jnp.zeros_like(acc_fn)
        acc_p[...] = jnp.zeros_like(acc_p)

    x = mask_ref[0].astype(jnp.float32)     # (Q, TK)   mask logits
    t = tgt_ref[0]                          # (8, TK)   bf16: 6 classes, ones row, zeros row

    # EUP-lean focal math: one softplus, sigmoid derived from it (~3 EUP ops / element).
    bce_pos = jnp.logaddexp(0.0, -x)        # softplus(-x) == BCE_with_logits(x, target=1)
    p = jnp.exp(-bce_pos)                   # sigmoid(x)   == exp(-softplus(-x))
    # softplus(x) = softplus(-x) + x; the exact-0 cancellation for very negative x is
    # harmless because focal_neg multiplies by p^2 ~ exp(2x).  Don't "fix" this.
    bce_neg = bce_pos + x
    one_m_p = 1.0 - p
    fp = (one_m_p * one_m_p) * bce_pos * ALPHA          # GAMMA == 2 -> explicit multiplies
    fn = (p * p) * bce_neg * (1.0 - ALPHA)

    # Three bf16 dots against the SAME resident target tile (no (3Q,TK) concat temporary).
    # The ones row of t makes lane NUM_TGT carry rowsum(fn)/rowsum(p) for free.
    acc_fp[...] += jnp.einsum('qk,mk->qm', fp.astype(jnp.bfloat16), t,
                              preferred_element_type=jnp.float32)
    acc_fn[...] += jnp.einsum('qk,mk->qm', fn.astype(jnp.bfloat16), t,
                              preferred_element_type=jnp.float32)
    acc_p[...] += jnp.einsum('qk,mk->qm', p.astype(jnp.bfloat16), t,
                             preferred_element_type=jnp.float32)

    @pl.when(k == pl.num_programs(1) - 1)
    def _():
        fp_t = acc_fp[:, :NUM_TGT]                       # (Q, 6)  fp @ t^T
        fn_t = acc_fn[:, :NUM_TGT]                       # (Q, 6)  fn @ t^T
        fn_sum = acc_fn[:, NUM_TGT:NUM_TGT + 1]          # (Q, 1)  rowsum(fn)
        p_t = acc_p[:, :NUM_TGT]                         # (Q, 6)  p @ t^T
        p_sum = acc_p[:, NUM_TGT:NUM_TGT + 1]            # (Q, 1)  rowsum(p)

        # focal cost: (fp @ t + fn @ (1 - t)) / hw == (fp@t - fn@t + rowsum(fn)) / hw
        cost_mask = (fp_t - fn_t + fn_sum) * (1.0 / hw)

        # dice cost
        denom = p_sum + tsum_ref[0]                      # (Q,1) + (1,6) -> (Q,6)
        cost_dice = 1.0 - (2.0 * p_t + 1.0) / (denom + 1.0)

        # cost_class: -softmax(logits)[:, 1:7]  (computed once, exact f32, tiny)
        logits = logits_ref[0].astype(jnp.float32)       # (Q, C)
        m = jnp.max(logits, axis=-1, keepdims=True)
        e = jnp.exp(logits - m)
        prob = e / jnp.sum(e, axis=-1, keepdims=True)
        cost_class = -prob[:, 1:1 + NUM_TGT]

        out_ref[0] = (COST_MASK * cost_mask
                      + COST_CLASS * cost_class
                      + COST_DICE * cost_dice).astype(out_ref.dtype)


def _pick_tile(hw, max_tk=8192):
    """Largest MXU-aligned divisor of hw (pref. multiple of 512, then 256/128) <= max_tk."""
    if hw % 128 != 0:
        return hw                      # full-extent block (legal: block == full dim)
    for align in (512, 256, 128):
        cands = [tk for tk in range(align, min(hw, max_tk) + 1, align) if hw % tk == 0]
        if cands:
            return max(cands)
    return hw


def compute_cost_matrices(pred_logits, pred_masks_flat, tgt_masks_flat, tk=None):
    B, Q, C = pred_logits.shape
    HW = pred_masks_flat.shape[-1]
    assert tgt_masks_flat.shape[1] == NUM_TGT
    if tk is None:
        tk = _pick_tile(HW)
    assert HW % tk == 0
    K = HW // tk

    tgt_f32 = tgt_masks_flat.astype(jnp.float32)
    # bf16 targets are exact for 0/1 masks: halves the (B,6,HW) DMA.  Ones row -> free
    # rowsums via the MXU; zeros row pads the class axis to 8 sublanes.
    tgt_aug = jnp.concatenate(
        [tgt_f32,
         jnp.ones((B, 1, HW), jnp.float32),
         jnp.zeros((B, 1, HW), jnp.float32)], axis=1).astype(jnp.bfloat16)
    tsum = jnp.sum(tgt_f32, axis=-1).reshape(B, 1, NUM_TGT)          # sum(t) per class

    out_bytes = B * Q * NUM_TGT * 4
    cost_est = pl.CostEstimate(
        flops=int(2 * B * (3 * Q) * HW * NT_PAD + 12 * B * Q * HW),
        transcendentals=int(3 * B * Q * HW),
        bytes_accessed=int(pred_logits.size * pred_logits.dtype.itemsize
                           + pred_masks_flat.size * pred_masks_flat.dtype.itemsize
                           + tgt_aug.size * 2 + tsum.size * 4 + out_bytes),
    )

    kernel = functools.partial(_cost_kernel, hw=HW)
    return pl.pallas_call(
        kernel,
        out_shape=jax.ShapeDtypeStruct((B, Q, NUM_TGT), jnp.float32),
        grid_spec=pltpu.PrefetchScalarGridSpec(
            num_scalar_prefetch=0,
            grid=(B, K),
            in_specs=[
                pl.BlockSpec((1, Q, C), lambda b, k: (b, 0, 0)),
                pl.BlockSpec((1, Q, tk), lambda b, k: (b, 0, k)),
                pl.BlockSpec((1, NT_PAD, tk), lambda b, k: (b, 0, k)),
                pl.BlockSpec((1, 1, NUM_TGT), lambda b, k: (b, 0, 0)),
            ],
            out_specs=pl.BlockSpec((1, Q, NUM_TGT), lambda b, k: (b, 0, 0)),
            scratch_shapes=[pltpu.VMEM((Q, NT_PAD), jnp.float32)] * 3,
        ),
        compiler_params=pltpu.CompilerParams(
            dimension_semantics=("parallel", "arbitrary"),   # batch sharded on v7x 2 TCs
            vmem_limit_bytes=48 * 1024 * 1024),               # headroom under v7x 64 MiB
        cost_estimate=cost_est,
    )(pred_logits, pred_masks_flat, tgt_aug, tsum)


# ------------------------------- JAX glue --------------------------------- #
def prepare_targets(gt, h, w):
    """one_hot -> permute -> nearest resize (like F.interpolate mode='nearest') -> flatten.

    Matches the PyTorch module exactly: one_hot(gt, 6) -> channels are labels 0..5, and
    cost_class independently indexes softmax classes 1..6 (tgt_ids = arange(1, 7))."""
    B, H, W = gt.shape
    tgt = jax.nn.one_hot(gt, NUM_TGT, dtype=jnp.float32)       # (B, H, W, 6)
    tgt = jnp.transpose(tgt, (0, 3, 1, 2))                     # (B, 6, H, W)
    ri = jnp.floor(jnp.arange(h) * (H / h)).astype(jnp.int32)  # PyTorch nearest index rule
    ci = jnp.floor(jnp.arange(w) * (W / w)).astype(jnp.int32)
    tgt = tgt[:, :, ri, :][:, :, :, ci]                        # (B, 6, h, w)
    return tgt.reshape(B, NUM_TGT, h * w)


def _linear_sum_assignment(cost):
    """Exact rectangular assignment via bitmask DP with parent pointers. Host-side numpy."""
    C = np.asarray(cost, dtype=np.float64)
    n, m = C.shape                      # n rows (queries), m columns (targets), n >= m here
    size = 1 << m
    dp = np.full((n + 1, size), np.inf)
    choice = np.full((n + 1, size), -1, dtype=np.int64)
    dp[0, 0] = 0.0
    for i in range(n):
        dp[i + 1, :] = dp[i, :]         # option: skip row i (choice stays -1)
        choice[i + 1, :] = -1
        for S in range(size):
            base = dp[i, S]
            if not np.isfinite(base):
                continue
            for j in range(m):
                if S & (1 << j):
                    continue
                NS = S | (1 << j)
                c = base + C[i, j]
                if c < dp[i + 1, NS]:
                    dp[i + 1, NS] = c
                    choice[i + 1, NS] = j
    S = size - 1
    rows, cols = [], []
    for i in range(n, 0, -1):
        j = int(choice[i, S])
        if j >= 0:
            rows.append(i - 1)
            cols.append(j)
            S ^= (1 << j)
    rows.reverse()
    cols.reverse()
    return (np.asarray(rows, dtype=np.int64), np.asarray(cols, dtype=np.int64))


def hungarian_matcher_forward(pred_logits, pred_masks, gt, tk=None):
    B, Q, h, w = pred_masks.shape
    masks_flat = pred_masks.reshape(B, Q, h * w)
    tgt_flat = prepare_targets(gt, h, w)
    cost = compute_cost_matrices(pred_logits, masks_flat, tgt_flat, tk=tk)
    cost_np = np.asarray(jax.block_until_ready(cost))
    indices = [_linear_sum_assignment(cost_np[b]) for b in range(B)]
    return cost, indices


# ------------------------- pure-JAX reference ------------------------------ #
def _reference_cost(pred_logits, masks_flat, tgt_flat):
    prob = jax.nn.softmax(pred_logits, axis=-1)
    cost_class = -prob[:, :, 1:1 + NUM_TGT]
    x = masks_flat
    p = jax.nn.sigmoid(x)
    bce_pos = jnp.logaddexp(0.0, -x)
    bce_neg = jnp.logaddexp(0.0, x)
    fp = ((1.0 - p) ** GAMMA) * bce_pos * ALPHA
    fn_ = (p ** GAMMA) * bce_neg * (1.0 - ALPHA)
    hw = x.shape[-1]
    cm = (jnp.einsum('bqc,bmc->bqm', fp, tgt_flat)
          + jnp.einsum('bqc,bmc->bqm', fn_, 1.0 - tgt_flat)) / hw
    num = 2.0 * jnp.einsum('bqc,bmc->bqm', p, tgt_flat)
    den = p.sum(-1)[:, :, None] + tgt_flat.sum(-1)[:, None, :]
    cd = 1.0 - (num + 1.0) / (den + 1.0)
    return COST_MASK * cm + COST_CLASS * cost_class + COST_DICE * cd


# --------------------------------- main ------------------------------------ #
if __name__ == "__main__":
    key = jax.random.PRNGKey(0)
    k1, k2, k3 = jax.random.split(key, 3)

    B, Q, C = 2, 8, 7         # batch, num_queries, softmax classes (>= 7 since tgt_ids = 1..6)
    h = w = 16                # pred_masks spatial size  -> HW = 256
    H = W = 32                # ground-truth label-map spatial size

    pred_logits = jax.random.normal(k1, (B, Q, C), dtype=jnp.float32)
    pred_masks = jax.random.normal(k2, (B, Q, h, w), dtype=jnp.float32)
    gt = jax.random.randint(k3, (B, H, W), 0, NUM_TGT, dtype=jnp.int32)

    # tk=128 -> 2 HW-reduction steps at these toy shapes, exercising the accumulator path.
    cost, indices = hungarian_matcher_forward(pred_logits, pred_masks, gt, tk=128)
    jax.block_until_ready(cost)

    # correctness check of the Pallas cost matrix vs pure-JAX (f32, exact-div) reference.
    # Tolerance covers the bf16 MXU operands (errors ~1e-3 on O(1) cost values);
    # real bugs are O(0.1-1).
    masks_flat = pred_masks.reshape(B, Q, h * w)
    tgt_flat = prepare_targets(gt, h, w)
    ref = _reference_cost(pred_logits, masks_flat, tgt_flat)
    np.testing.assert_allclose(np.asarray(cost), np.asarray(ref), rtol=2e-2, atol=2e-2)

    # sanity on assignment output structure (matches module's return type semantics)
    assert len(indices) == B
    for i_idx, j_idx in indices:
        assert i_idx.dtype == np.int64 and j_idx.dtype == np.int64
        assert len(i_idx) == NUM_TGT and len(j_idx) == NUM_TGT
        assert len(set(j_idx.tolist())) == NUM_TGT

    print("KERNEL_OK")
</pallas_src>

<mosaic_0001>
module attributes {stable_mosaic.version = 11 : i64} {
  func.func @_cost_kernel(%arg0: i32, %arg1: i32, %arg2: memref<1x8x7xf32, #tpu.memory_space<vmem>>, %arg3: memref<1x8x128xf32, #tpu.memory_space<vmem>>, %arg4: memref<1x8x128xbf16, #tpu.memory_space<vmem>>, %arg5: memref<1x1x6xf32, #tpu.memory_space<vmem>>, %arg6: memref<1x8x6xf32, #tpu.memory_space<vmem>>, %arg7: memref<8x8xf32, #tpu.memory_space<vmem>>, %arg8: memref<8x8xf32, #tpu.memory_space<vmem>>, %arg9: memref<8x8xf32, #tpu.memory_space<vmem>>) attributes {dimension_semantics = [#tpu.dimension_semantics<parallel>, #tpu.dimension_semantics<arbitrary>], iteration_bounds = array<i64: 2, 2>, scalar_prefetch = 0 : i64, scratch_operands = 3 : i64, tpu.core_type = #tpu.core_type<tc>, window_params = [{transform_indices = @transform_0, window_bounds = array<i64: 1, 8, 7>}, {transform_indices = @transform_1, window_bounds = array<i64: 1, 8, 128>}, {transform_indices = @transform_2, window_bounds = array<i64: 1, 8, 128>}, {transform_indices = @transform_3, window_bounds = array<i64: 1, 1, 6>}, {transform_indices = @transform_4, window_bounds = array<i64: 1, 8, 6>}]} {
    %c0_i32 = arith.constant 0 : i32
    %0 = arith.cmpi eq, %arg1, %c0_i32 : i32
    %1 = arith.extui %0 : i1 to i32
    %c0_i32_0 = arith.constant 0 : i32
    %2 = arith.cmpi ne, %1, %c0_i32_0 : i32
    scf.if %2 {
      %cst_28 = arith.constant 0.000000e+00 : f32
      %55 = vector.broadcast %cst_28 : f32 to vector<8x8xf32>
      %c0_29 = arith.constant 0 : index
      %c0_30 = arith.constant 0 : index
      %56 = vector.load %arg7[%c0_29, %c0_30] : memref<8x8xf32, #tpu.memory_space<vmem>>, vector<8x8xf32>
      tpu.vector_store %arg7[%c0_29, %c0_30], %55 {strides = array<i32>} : memref<8x8xf32, #tpu.memory_space<vmem>>, vector<8x8xf32>,
      %cst_31 = arith.constant 0.000000e+00 : f32
      %57 = vector.broadcast %cst_31 : f32 to vector<8x8xf32>
      %c0_32 = arith.constant 0 : index
      %c0_33 = arith.constant 0 : index
      %58 = vector.load %arg8[%c0_32, %c0_33] : memref<8x8xf32, #tpu.memory_space<vmem>>, vector<8x8xf32>
      tpu.vector_store %arg8[%c0_32, %c0_33], %57 {strides = array<i32>} : memref<8x8xf32, #tpu.memory_space<vmem>>, vector<8x8xf32>,
      %cst_34 = arith.constant 0.000000e+00 : f32
      %59 = vector.broadcast %cst_34 : f32 to vector<8x8xf32>
      %c0_35 = arith.constant 0 : index
      %c0_36 = arith.constant 0 : index
      %60 = vector.load %arg9[%c0_35, %c0_36] : memref<8x8xf32, #tpu.memory_space<vmem>>, vector<8x8xf32>
      tpu.vector_store %arg9[%c0_35, %c0_36], %59 {strides = array<i32>} : memref<8x8xf32, #tpu.memory_space<vmem>>, vector<8x8xf32>,
    } else {
    }
    %c0 = arith.constant 0 : index
    %c0_1 = arith.constant 0 : index
    %c0_2 = arith.constant 0 : index
    %3 = vector.load %arg3[%c0, %c0_1, %c0_2] : memref<1x8x128xf32, #tpu.memory_space<vmem>>, vector<1x8x128xf32>
    %4 = vector.shape_cast %3 : vector<1x8x128xf32> to vector<8x128xf32>
    %c0_3 = arith.constant 0 : index
    %c0_4 = arith.constant 0 : index
    %c0_5 = arith.constant 0 : index
    %5 = vector.load %arg4[%c0_3, %c0_4, %c0_5] : memref<1x8x128xbf16, #tpu.memory_space<vmem>>, vector<1x8x128xbf16>
    %6 = vector.shape_cast %5 : vector<1x8x128xbf16> to vector<8x128xbf16>
    %cst = arith.constant 0.000000e+00 : f32
    %7 = vector.broadcast %cst : f32 to vector<8x128xf32>
    %8 = arith.subf %7, %4 : vector<8x128xf32>
    %cst_6 = arith.constant 0.000000e+00 : f32
    %9 = vector.broadcast %cst_6 : f32 to vector<8x128xf32>
    %10 = arith.maximumf %9, %8 : vector<8x128xf32>
    %11 = vector.broadcast %cst_6 : f32 to vector<8x128xf32>
    %12 = arith.subf %11, %8 : vector<8x128xf32>
    %13 = arith.cmpf one, %12, %12 : vector<8x128xf32>
    %14 = vector.broadcast %cst_6 : f32 to vector<8x128xf32>
    %15 = arith.addf %14, %8 : vector<8x128xf32>
    %16 = math.absf %12 : vector<8x128xf32>
    %cst_7 = arith.constant 0.000000e+00 : f32
    %17 = vector.broadcast %cst_7 : f32 to vector<8x128xf32>
    %18 = arith.subf %17, %16 : vector<8x128xf32>
    %19 = math.exp %18 : vector<8x128xf32>
    %20 = math.log1p %19 : vector<8x128xf32>
    %21 = arith.addf %10, %20 : vector<8x128xf32>
    %22 = arith.select %13, %15, %21 : vector<8x128xi1>, vector<8x128xf32>
    %cst_8 = arith.constant 0.000000e+00 : f32
    %23 = vector.broadcast %cst_8 : f32 to vector<8x128xf32>
    %24 = arith.subf %23, %22 : vector<8x128xf32>
    %25 = math.exp %24 : vector<8x128xf32>
    %26 = arith.addf %22, %4 : vector<8x128xf32>
    %cst_9 = arith.constant 1.000000e+00 : f32
    %27 = vector.broadcast %cst_9 : f32 to vector<8x128xf32>
    %28 = arith.subf %27, %25 : vector<8x128xf32>
    %29 = arith.mulf %28, %28 : vector<8x128xf32>
    %30 = arith.mulf %29, %22 : vector<8x128xf32>
    %cst_10 = arith.constant 2.500000e-01 : f32
    %31 = vector.broadcast %cst_10 : f32 to vector<8x128xf32>
    %32 = arith.mulf %30, %31 : vector<8x128xf32>
    %33 = arith.mulf %25, %25 : vector<8x128xf32>
    %34 = arith.mulf %33, %26 : vector<8x128xf32>
    %cst_11 = arith.constant 7.500000e-01 : f32
    %35 = vector.broadcast %cst_11 : f32 to vector<8x128xf32>
    %36 = arith.mulf %34, %35 : vector<8x128xf32>
    %c0_12 = arith.constant 0 : index
    %c0_13 = arith.constant 0 : index
    %37 = vector.load %arg7[%c0_12, %c0_13] : memref<8x8xf32, #tpu.memory_space<vmem>>, vector<8x8xf32>
    %38 = arith.truncf %32 : vector<8x128xf32> to vector<8x128xbf16>
    "tpu.trace_start"() <{level = 10 : i32, message = "qk,mk->qm"}> : () -> ()
    %cst_14 = arith.constant dense<0.000000e+00> : vector<8x8xf32>
    %39 = tpu.matmul %38, %6, %cst_14 {dimension_numbers = #tpu.dot_dimension_numbers<[1], [1], [0], [0], [0, 0, 1, 0], [], []>} : vector<8x128xbf16>, vector<8x128xbf16>, vector<8x8xf32> -> vector<8x8xf32>
    "tpu.trace_stop"() : () -> ()
    %40 = arith.addf %37, %39 : vector<8x8xf32>
    %c0_15 = arith.constant 0 : index
    %c0_16 = arith.constant 0 : index
    %41 = vector.load %arg7[%c0_15, %c0_16] : memref<8x8xf32, #tpu.memory_space<vmem>>, vector<8x8xf32>
    tpu.vector_store %arg7[%c0_15, %c0_16], %40 {strides = array<i32>} : memref<8x8xf32, #tpu.memory_space<vmem>>, vector<8x8xf32>,
    %c0_17 = arith.constant 0 : index
    %c0_18 = arith.constant 0 : index
    %42 = vector.load %arg8[%c0_17, %c0_18] : memref<8x8xf32, #tpu.memory_space<vmem>>, vector<8x8xf32>
    %43 = arith.truncf %36 : vector<8x128xf32> to vector<8x128xbf16>
    "tpu.trace_start"() <{level = 10 : i32, message = "qk,mk->qm"}> : () -> ()
    %cst_19 = arith.constant dense<0.000000e+00> : vector<8x8xf32>
    %44 = tpu.matmul %43, %6, %cst_19 {dimension_numbers = #tpu.dot_dimension_numbers<[1], [1], [0], [0], [0, 0, 1, 0], [], []>} : vector<8x128xbf16>, vector<8x128xbf16>, vector<8x8xf32> -> vector<8x8xf32>
    "tpu.trace_stop"() : () -> ()
    %45 = arith.addf %42, %44 : vector<8x8xf32>
    %c0_20 = arith.constant 0 : index
    %c0_21 = arith.constant 0 : index
    %46 = vector.load %arg8[%c0_20, %c0_21] : memref<8x8xf32, #tpu.memory_space<vmem>>, vector<8x8xf32>
    tpu.vector_store %arg8[%c0_20, %c0_21], %45 {strides = array<i32>} : memref<8x8xf32, #tpu.memory_space<vmem>>, vector<8x8xf32>,
    %c0_22 = arith.constant 0 : index
    %c0_23 = arith.constant 0 : index
    %47 = vector.load %arg9[%c0_22, %c0_23] : memref<8x8xf32, #tpu.memory_space<vmem>>, vector<8x8xf32>
    %48 = arith.truncf %25 : vector<8x128xf32> to vector<8x128xbf16>
    "tpu.trace_start"() <{level = 10 : i32, message = "qk,mk->qm"}> : () -> ()
    %cst_24 = arith.constant dense<0.000000e+00> : vector<8x8xf32>
    %49 = tpu.matmul %48, %6, %cst_24 {dimension_numbers = #tpu.dot_dimension_numbers<[1], [1], [0], [0], [0, 0, 1, 0], [], []>} : vector<8x128xbf16>, vector<8x128xbf16>, vector<8x8xf32> -> vector<8x8xf32>
    "tpu.trace_stop"() : () -> ()
    %50 = arith.addf %47, %49 : vector<8x8xf32>
    %c0_25 = arith.constant 0 : index
    %c0_26 = arith.constant 0 : index
    %51 = vector.load %arg9[%c0_25, %c0_26] : memref<8x8xf32, #tpu.memory_space<vmem>>, vector<8x8xf32>
    tpu.vector_store %arg9[%c0_25, %c0_26], %50 {strides = array<i32>} : memref<8x8xf32, #tpu.memory_space<vmem>>, vector<8x8xf32>,
    %c1_i32 = arith.constant 1 : i32
    %52 = arith.cmpi eq, %arg1, %c1_i32 : i32
    %53 = arith.extui %52 : i1 to i32
    %c0_i32_27 = arith.constant 0 : i32
    %54 = arith.cmpi ne, %53, %c0_i32_27 : i32
    scf.if %54 {
      %c0_28 = arith.constant 0 : index
      %c0_29 = arith.constant 0 : index
      %55 = vector.load %arg7[%c0_28, %c0_29] : memref<8x8xf32, #tpu.memory_space<vmem>>, vector<8x6xf32>
      %c0_30 = arith.constant 0 : index
      %c0_31 = arith.constant 0 : index
      %56 = vector.load %arg8[%c0_30, %c0_31] : memref<8x8xf32, #tpu.memory_space<vmem>>, vector<8x6xf32>
      %c0_32 = arith.constant 0 : index
      %c6 = arith.constant 6 : index
      %57 = vector.load %arg8[%c0_32, %c6] : memref<8x8xf32, #tpu.memory_space<vmem>>, vector<8x1xf32>
      %c0_33 = arith.constant 0 : index
      %c0_34 = arith.constant 0 : index
      %58 = vector.load %arg9[%c0_33, %c0_34] : memref<8x8xf32, #tpu.memory_space<vmem>>, vector<8x6xf32>
      %c0_35 = arith.constant 0 : index
      %c6_36 = arith.constant 6 : index
      %59 = vector.load %arg9[%c0_35, %c6_36] : memref<8x8xf32, #tpu.memory_space<vmem>>, vector<8x1xf32>
      %60 = arith.subf %55, %56 : vector<8x6xf32>
      %61 = vector.broadcast %57 : vector<8x1xf32> to vector<8x6xf32>
      %62 = arith.addf %60, %61 : vector<8x6xf32>
      %cst_37 = arith.constant 3.906250e-03 : f32
      %63 = vector.broadcast %cst_37 : f32 to vector<8x6xf32>
      %64 = arith.mulf %62, %63 : vector<8x6xf32>
      %c0_38 = arith.constant 0 : index
      %c0_39 = arith.constant 0 : index
      %c0_40 = arith.constant 0 : index
      %65 = vector.load %arg5[%c0_38, %c0_39, %c0_40] : memref<1x1x6xf32, #tpu.memory_space<vmem>>, vector<1x1x6xf32>
      %66 = vector.shape_cast %65 : vector<1x1x6xf32> to vector<1x6xf32>
      %67 = vector.broadcast %59 : vector<8x1xf32> to vector<8x6xf32>
      %68 = vector.broadcast %66 : vector<1x6xf32> to vector<8x6xf32>
      %69 = arith.addf %67, %68 : vector<8x6xf32>
      %cst_41 = arith.constant 2.000000e+00 : f32
      %70 = vector.broadcast %cst_41 : f32 to vector<8x6xf32>
      %71 = arith.mulf %70, %58 : vector<8x6xf32>
      %cst_42 = arith.constant 1.000000e+00 : f32
      %72 = vector.broadcast %cst_42 : f32 to vector<8x6xf32>
      %73 = arith.addf %71, %72 : vector<8x6xf32>
      %cst_43 = arith.constant 1.000000e+00 : f32
      %74 = vector.broadcast %cst_43 : f32 to vector<8x6xf32>
      %75 = arith.addf %69, %74 : vector<8x6xf32>
      %76 = arith.divf %73, %75 : vector<8x6xf32>
      %cst_44 = arith.constant 1.000000e+00 : f32
      %77 = vector.broadcast %cst_44 : f32 to vector<8x6xf32>
      %78 = arith.subf %77, %76 : vector<8x6xf32>
      %c0_45 = arith.constant 0 : index
      %c0_46 = arith.constant 0 : index
      %c0_47 = arith.constant 0 : index
      %79 = vector.load %arg2[%c0_45, %c0_46, %c0_47] : memref<1x8x7xf32, #tpu.memory_space<vmem>>, vector<1x8x7xf32>
      %80 = vector.shape_cast %79 : vector<1x8x7xf32> to vector<8x7xf32>
      %cst_48 = arith.constant dense<0xFF800000> : vector<8xf32>
      %81 = vector.multi_reduction <maximumf>, %80, %cst_48 [1] : vector<8x7xf32> to vector<8xf32>
      %82 = vector.shape_cast %81 : vector<8xf32> to vector<8x1xf32>
      %83 = vector.broadcast %82 : vector<8x1xf32> to vector<8x7xf32>
      %84 = arith.subf %80, %83 : vector<8x7xf32>
      %85 = math.exp %84 : vector<8x7xf32>
      %cst_49 = arith.constant dense<0.000000e+00> : vector<8xf32>
      %86 = vector.multi_reduction <add>, %85, %cst_49 [1] : vector<8x7xf32> to vector<8xf32>
      %87 = vector.shape_cast %86 : vector<8xf32> to vector<8x1xf32>
      %88 = vector.broadcast %87 : vector<8x1xf32> to vector<8x7xf32>
      %89 = arith.divf %85, %88 : vector<8x7xf32>
      %90 = vector.extract_strided_slice %89 {offsets = [0, 1], sizes = [8, 6], strides = [1, 1]} : vector<8x7xf32> to vector<8x6xf32>
      %cst_50 = arith.constant 0.000000e+00 : f32
      %91 = vector.broadcast %cst_50 : f32 to vector<8x6xf32>
      %92 = arith.subf %91, %90 : vector<8x6xf32>
      %cst_51 = arith.constant 1.000000e+00 : f32
      %93 = vector.broadcast %cst_51 : f32 to vector<8x6xf32>
      %94 = arith.mulf %93, %64 : vector<8x6xf32>
      %cst_52 = arith.constant 1.000000e+00 : f32
      %95 = vector.broadcast %cst_52 : f32 to vector<8x6xf32>
      %96 = arith.mulf %95, %92 : vector<8x6xf32>
      %97 = arith.addf %94, %96 : vector<8x6xf32>
      %cst_53 = arith.constant 1.000000e+00 : f32
      %98 = vector.broadcast %cst_53 : f32 to vector<8x6xf32>
      %99 = arith.mulf %98, %78 : vector<8x6xf32>
      %100 = arith.addf %97, %99 : vector<8x6xf32>
      %c0_54 = arith.constant 0 : index
      %c0_55 = arith.constant 0 : index
      %c0_56 = arith.constant 0 : index
      %101 = vector.load %arg6[%c0_54, %c0_55, %c0_56] : memref<1x8x6xf32, #tpu.memory_space<vmem>>, vector<1x8x6xf32>
      %102 = vector.shape_cast %101 : vector<1x8x6xf32> to vector<8x6xf32>
      %103 = vector.shape_cast %100 : vector<8x6xf32> to vector<1x8x6xf32>
      tpu.vector_store %arg6[%c0_54, %c0_55, %c0_56], %103 {strides = array<i32>} : memref<1x8x6xf32, #tpu.memory_space<vmem>>, vector<1x8x6xf32>,
    } else {
    }
    return
  }
  func.func @transform_0(%arg0: i32, %arg1: i32) -> (i32, i32, i32) {
    %c0_i32 = arith.constant 0 : i32
    %c0_i32_0 = arith.constant 0 : i32
    %c0_i32_1 = arith.constant 0 : i32
    return %arg0, %c0_i32, %c0_i32_0 : i32, i32, i32
  }
  func.func @transform_1(%arg0: i32, %arg1: i32) -> (i32, i32, i32) {
    %c0_i32 = arith.constant 0 : i32
    %c0_i32_0 = arith.constant 0 : i32
    return %arg0, %c0_i32, %arg1 : i32, i32, i32
  }
  func.func @transform_2(%arg0: i32, %arg1: i32) -> (i32, i32, i32) {
    %c0_i32 = arith.constant 0 : i32
    %c0_i32_0 = arith.constant 0 : i32
    return %arg0, %c0_i32, %arg1 : i32, i32, i32
  }
  func.func @transform_3(%arg0: i32, %arg1: i32) -> (i32, i32, i32) {
    %c0_i32 = arith.constant 0 : i32
    %c0_i32_0 = arith.constant 0 : i32
    %c0_i32_1 = arith.constant 0 : i32
    return %arg0, %c0_i32, %c0_i32_0 : i32, i32, i32
  }
  func.func @transform_4(%arg0: i32, %arg1: i32) -> (i32, i32, i32) {
    %c0_i32 = arith.constant 0 : i32
    %c0_i32_0 = arith.constant 0 : i32
    %c0_i32_1 = arith.constant 0 : i32
    return %arg0, %c0_i32, %c0_i32_0 : i32, i32, i32
  }
}

</mosaic_0001>

<llo_original>
// kernel: tpu_custom_call.1
$region0: #{tpu_custom_call.1}
  #allocation0 [shape = 'u32[]', space=smem, size = 0x4, offset = 0x4, fixed_abs, tag = 'smem constant byte address 0x4 - core index']
  #allocation1 [shape = 'u32[144,128]{1,0:T(1,128)}', space=vmem, size = 0x12000, scoped, tag = 'internal scratch']
  #allocation2 [shape = 'f32[8,8]{1,0:T(8,128)}', space=vmem, size = 0x1000, scoped, tag = 'scratch operand']
  #allocation3 [shape = 'f32[8,8]{1,0:T(8,128)}', space=vmem, size = 0x1000, scoped, tag = 'scratch operand']
  #allocation4 [shape = 'f32[8,8]{1,0:T(8,128)}', space=vmem, size = 0x1000, scoped, tag = 'scratch operand']
  %s0 = inlined_call_operand.vmem [shape: f32[2,8,7], index: 0, kind: input, shape index: {}]
  %s1 = inlined_call_operand.vmem [shape: f32[2,8,256], index: 1, kind: input, shape index: {}]
  %s2 = inlined_call_operand.hbm [shape: bf16[2,8,256], index: 2, kind: input, shape index: {}]
  %s3 = inlined_call_operand.vmem [shape: f32[2,1,6], index: 3, kind: input, shape index: {}]
  %s4 = inlined_call_operand.vmem [shape: f32[2,8,6], index: 4, kind: output, shape index: {}]
  %s5 = sld [smem:[#allocation0]]
  $region61: #{tpu_custom_call.1} parent=0
    _
  %s7 = ssub.s32 1, %s5
  %s8 = scalar_select 0, %s7, %s5
  $region1: #{tpu_custom_call.1} parent=0
    #allocation5 [shape = 'u8[4096]{0}', space=vmem, size = 0x1000, scoped, tag = 'input window, operand 2']
    #allocation6 [shape = 's32[2]{0}', space=sflag, size = 0x8, scoped, tag = 'scoped memory for tpu_custom_call.1']
    %9 = vsyncpa [#allocation6], 0
    %s10 = scalar_lea.sflag [#allocation6], 1
    %11 = vsyncpa %s10, 0
    loop: start=0, step=1, limit=6
    $region2: #{tpu_custom_call.1} parent=1 // loop_pre_header
      _
    $region3: #{tpu_custom_call.1} parent=1 // loop_header
      %s13 = sphi 0, %s17
      %p14 = scmp.ge.s32.totalorder %s13, 6
      %s20 = sphi 0, %s32
      %s21 = sphi 0, %s28
      %s22 = sphi 0, %s20
      %s23 = sphi 0, %s21
      %s24 = sphi 0, %s22
      %s25 = sphi 0, %s23
      %s35 = sphi 0, %s37
      %s38 = sphi 0, %s35
      %s39 = sphi 0, %s38
      %s55 = sphi 0, %s39
      %s63 = sphi 0, %s65
      %s66 = sphi 0, %s63
      %s67 = sphi 0, %s66
      %s83 = sphi 0, %s67
      %s91 = sphi 0, %s93
      %s94 = sphi 0, %s91
      %s95 = sphi 0, %s94
      %s111 = sphi 0, %s95
      %s117 = sphi 0, %s119
      %s120 = sphi 0, %s117
      %s121 = sphi 0, %s120
      %s137 = sphi 0, %s121
      %s143 = sphi 0, %s145
      %s146 = sphi 0, %s143
      %s147 = sphi 0, %s146
      %s163 = sphi 0, %s147
    $region4: #{tpu_custom_call.1} parent=1 // loop_header_branch
      %16 = sbr.rel (%p14) target = $region8
    $region5: #{tpu_custom_call.1} parent=1 // loop_body
      %s18 = ssub.s32 %s13, 1
      %s19 = ssub.s32 %s13, 2
      %s26 = sadd.s32 1, %s21
      %p27 = scmp.ge.s32.totalorder %s26, 2
      %s28 = scalar_select %p27, 0, %s26
      %s29 = sadd.s32 1, %s20
      %s30 = scalar_select %p27, %s29, %s20
      %p31 = scmp.ge.s32.totalorder %s30, 2
      %s32 = scalar_select %p31, 0, %s30
      %s33 = ssub.s32 %s20, %s32
      %p34 = scmp.eq.s32.totalorder %s33, 0
      %s36 = sadd.s32 %s35, 1
      %s37 = scalar_select %p34, %s35, %s36
      %p40 = pneg %p34
      %p41 = scmp.eq.s32.totalorder %s13, 3
      %p42 = por %p40, %p41
      %p43 = scmp.ne.s32.totalorder %s35, %s38
      %p44 = scmp.eq.s32.totalorder %s13, 0
      %p45 = por %p43, %p44
      %p46 = scmp.ne.s32.totalorder %s35, %s38
      %p47 = scmp.eq.s32.totalorder %s18, 3
      %p48 = por %p46, %p47
      %p49 = scmp.ne.s32.totalorder %s38, %s39
      %p50 = scmp.eq.s32.totalorder %s18, 0
      %p51 = por %p49, %p50
      %p52 = scmp.ne.s32.totalorder %s38, %s39
      %p53 = scmp.eq.s32.totalorder %s19, 3
      %p54 = por %p52, %p53
      %p56 = scmp.ne.s32.totalorder %s39, %s55
      %p57 = scmp.eq.s32.totalorder %s19, 0
      %p58 = por %p56, %p57
      %s59 = ssub.s32 %s20, %s32
      %s60 = ssub.s32 %s21, %s28
      %s61 = sor.u32 %s59, %s60
      %p62 = scmp.eq.s32.totalorder %s61, 0
      %s64 = sadd.s32 %s63, 1
      %s65 = scalar_select %p62, %s63, %s64
      %p68 = pneg %p62
      %p69 = scmp.eq.s32.totalorder %s13, 3
      %p70 = por %p68, %p69
      %p71 = scmp.ne.s32.totalorder %s63, %s66
      %p72 = scmp.eq.s32.totalorder %s13, 0
      %p73 = por %p71, %p72
      %p74 = scmp.ne.s32.totalorder %s63, %s66
      %p75 = scmp.eq.s32.totalorder %s18, 3
      %p76 = por %p74, %p75
      %p77 = scmp.ne.s32.totalorder %s66, %s67
      %p78 = scmp.eq.s32.totalorder %s18, 0
      %p79 = por %p77, %p78
      %p80 = scmp.ne.s32.totalorder %s66, %s67
      %p81 = scmp.eq.s32.totalorder %s19, 3
      %p82 = por %p80, %p81
      %p84 = scmp.ne.s32.totalorder %s67, %s83
      %p85 = scmp.eq.s32.totalorder %s19, 0
      %p86 = por %p84, %p85
      %s87 = ssub.s32 %s20, %s32
      %s88 = ssub.s32 %s21, %s28
      %s89 = sor.u32 %s87, %s88
      %p90 = scmp.eq.s32.totalorder %s89, 0
      %s92 = sadd.s32 %s91, 1
      %s93 = scalar_select %p90, %s91, %s92
      %p96 = pneg %p90
      %p97 = scmp.eq.s32.totalorder %s13, 3
      %p98 = por %p96, %p97
      %p99 = scmp.ne.s32.totalorder %s91, %s94
      %p100 = scmp.eq.s32.totalorder %s13, 0
      %p101 = por %p99, %p100
      %p102 = scmp.ne.s32.totalorder %s91, %s94
      %p103 = scmp.eq.s32.totalorder %s18, 3
      %p104 = por %p102, %p103
      %p105 = scmp.ne.s32.totalorder %s94, %s95
      %p106 = scmp.eq.s32.totalorder %s18, 0
      %p107 = por %p105, %p106
      %p108 = scmp.ne.s32.totalorder %s94, %s95
      %p109 = scmp.eq.s32.totalorder %s19, 3
      %p110 = por %p108, %p109
      %p112 = scmp.ne.s32.totalorder %s95, %s111
      %p113 = scmp.eq.s32.totalorder %s19, 0
      %p114 = por %p112, %p113
      %s115 = ssub.s32 %s20, %s32
      %p116 = scmp.eq.s32.totalorder %s115, 0
      %s118 = sadd.s32 %s117, 1
      %s119 = scalar_select %p116, %s117, %s118
      %p122 = pneg %p116
      %p123 = scmp.eq.s32.totalorder %s13, 3
      %p124 = por %p122, %p123
      %p125 = scmp.ne.s32.totalorder %s117, %s120
      %p126 = scmp.eq.s32.totalorder %s13, 0
      %p127 = por %p125, %p126
      %p128 = scmp.ne.s32.totalorder %s117, %s120
      %p129 = scmp.eq.s32.totalorder %s18, 3
      %p130 = por %p128, %p129
      %p131 = scmp.ne.s32.totalorder %s120, %s121
      %p132 = scmp.eq.s32.totalorder %s18, 0
      %p133 = por %p131, %p132
      %p134 = scmp.ne.s32.totalorder %s120, %s121
      %p135 = scmp.eq.s32.totalorder %s19, 3
      %p136 = por %p134, %p135
      %p138 = scmp.ne.s32.totalorder %s121, %s137
      %p139 = scmp.eq.s32.totalorder %s19, 0
      %p140 = por %p138, %p139
      %s141 = ssub.s32 %s20, %s32
      %p142 = scmp.eq.s32.totalorder %s141, 0
      %s144 = sadd.s32 %s143, 1
      %s145 = scalar_select %p142, %s143, %s144
      %p148 = pneg %p142
      %p149 = scmp.eq.s32.totalorder %s13, 3
      %p150 = por %p148, %p149
      %p151 = scmp.ne.s32.totalorder %s143, %s146
      %p152 = scmp.eq.s32.totalorder %s13, 0
      %p153 = por %p151, %p152
      %p154 = scmp.ne.s32.totalorder %s143, %s146
      %p155 = scmp.eq.s32.totalorder %s18, 3
      %p156 = por %p154, %p155
      %p157 = scmp.ne.s32.totalorder %s146, %s147
      %p158 = scmp.eq.s32.totalorder %s18, 0
      %p159 = por %p157, %p158
      %p160 = scmp.ne.s32.totalorder %s146, %s147
      %p161 = scmp.eq.s32.totalorder %s19, 3
      %p162 = por %p160, %p161
      %p164 = scmp.ne.s32.totalorder %s147, %s163
      %p165 = scmp.eq.s32.totalorder %s19, 0
      %p166 = por %p164, %p165
      %p167 = scmp.le.s32.totalorder 1, %s13
      %p168 = scmp.lt.s32.totalorder %s13, 5
      %p169 = pnand %p167, %p168
      %p170 = pneg %p169
      // Predicated region
      $region9: #{tpu_custom_call.1} parent=5 // pred_check
        _
      $region10: #{tpu_custom_call.1} parent=5 // pred_check_branch
        %172 = sbr.rel (%p169) target = $region12
      $region11: #{tpu_custom_call.1} parent=5 // pred_region
        %s173 = ssub.s32 %s13, 1
      $region12: #{tpu_custom_call.1} parent=5 // pred_fallthru
        _
      %p174 = scmp.lt.s32.totalorder %s13, 4
      // Predicated region
      $region13: #{tpu_custom_call.1} parent=5 // pred_check
        %p175 = pneg %p174
      $region14: #{tpu_custom_call.1} parent=5 // pred_check_branch
        %177 = sbr.rel (%p175) target = $region16
      $region15: #{tpu_custom_call.1} parent=5 // pred_region
        // Predicated region
        $region17: #{tpu_custom_call.1} parent=15 // pred_check
          %p178 = pneg %p45
        $region18: #{tpu_custom_call.1} parent=15 // pred_check_branch
          %180 = sbr.rel (%p178) target = $region20
        $region19: #{tpu_custom_call.1} parent=15 // pred_region
          %p181 = scmp.lt.s32.totalorder %s20, 1
          %s182 = scalar_select %p181, %s20, 1
          %s183 = smul.addr %s182, 8
          %s184 = scalar_lea.vmem %s0, %s183
        $region20: #{tpu_custom_call.1} parent=15 // pred_fallthru
          _
        // Predicated region
        $region21: #{tpu_custom_call.1} parent=15 // pred_check
          %p185 = pneg %p73
        $region22: #{tpu_custom_call.1} parent=15 // pred_check_branch
          %187 = sbr.rel (%p185) target = $region24
        $region23: #{tpu_custom_call.1} parent=15 // pred_region
          %p188 = scmp.lt.s32.totalorder %s20, 1
          %s189 = scalar_select %p188, %s20, 1
          %p190 = scmp.lt.s32.totalorder %s21, 1
          %s191 = scalar_select %p190, %s21, 1
          %s192 = smul.addr %s189, 2
          %s193 = sadd.s32 %s191, %s192
          %s194 = smul.addr %s193, 8
          %s195 = scalar_lea.vmem %s1, %s194
        $region24: #{tpu_custom_call.1} parent=15 // pred_fallthru
          _
        // Predicated region
        $region25: #{tpu_custom_call.1} parent=15 // pred_check
          %p196 = pneg %p101
        $region26: #{tpu_custom_call.1} parent=15 // pred_check_branch
          %198 = sbr.rel (%p196) target = $region28
        $region27: #{tpu_custom_call.1} parent=15 // pred_region
          %s199 = sand.u32 %s91, 1
          %s200 = scalar_lea.sflag [#allocation6], %s199
          %s201 = sand.u32 %s91, 1
          %s202 = smul.addr %s201, 4
          %s203 = scalar_lea.vmem [#allocation5], %s202
          %s205 = ssub.s32 64, 64
          %206 = vsyncadd %s200, %s205
          %s207 = smul.addr %s20, 2
          %s208 = sadd.s32 %s21, %s207
          %s209 = smul.addr %s208, 64
          %s210 = scalar_lea.hbm %s2, %s209
          %s212 = sshll.u32 %s203, 4
          %s213 = int_to_ptr.vmem [resolvable:$true] %s212
          %215 = dma.hbm_to_vmem [thread:$0]  %s210, 64, %s213, %s200
        $region28: #{tpu_custom_call.1} parent=15 // pred_fallthru
          _
        // Predicated region
        $region29: #{tpu_custom_call.1} parent=15 // pred_check
          %p216 = pneg %p127
        $region30: #{tpu_custom_call.1} parent=15 // pred_check_branch
          %218 = sbr.rel (%p216) target = $region32
        $region31: #{tpu_custom_call.1} parent=15 // pred_region
          %p219 = scmp.lt.s32.totalorder %s20, 1
          %s220 = scalar_select %p219, %s20, 1
          %s221 = scalar_lea.vmem %s3, %s220
        $region32: #{tpu_custom_call.1} parent=15 // pred_fallthru
          _
      $region16: #{tpu_custom_call.1} parent=5 // pred_fallthru
        _
      %p222 = scmp.le.s32.totalorder 1, %s13
      %p223 = scmp.lt.s32.totalorder %s13, 5
      %p224 = pnand %p222, %p223
      %p225 = pneg %p224
      // Predicated region
      $region33: #{tpu_custom_call.1} parent=5 // pred_check
        _
      $region34: #{tpu_custom_call.1} parent=5 // pred_check_branch
        %227 = sbr.rel (%p224) target = $region36
      $region35: #{tpu_custom_call.1} parent=5 // pred_region
        %s228 = ssub.s32 %s13, 1
        %s229 = sand.u32 %s94, 1
        %s230 = scalar_lea.sflag [#allocation6], %s229
        %s231 = sand.u32 %s94, 1
        %s232 = smul.addr %s231, 4
        %s233 = scalar_lea.vmem [#allocation5], %s232
        // Predicated region
        $region37: #{tpu_custom_call.1} parent=35 // pred_check
          %p234 = pneg %p107
        $region38: #{tpu_custom_call.1} parent=35 // pred_check_branch
          %236 = sbr.rel (%p234) target = $region40
        $region39: #{tpu_custom_call.1} parent=35 // pred_region
          %237 = dma.done %s230, 64
        $region40: #{tpu_custom_call.1} parent=35 // pred_fallthru
          _
        %p238 = scmp.lt.s32.totalorder %s22, 1
        %s239 = scalar_select %p238, %s22, 1
        %s240 = smul.addr %s239, 8
        %s241 = scalar_lea.vmem %s0, %s240
        %p242 = pneg %p51
        %p243 = pneg %p48
        %p244 = scmp.lt.s32.totalorder %s22, 1
        %s245 = scalar_select %p244, %s22, 1
        %p246 = scmp.lt.s32.totalorder %s23, 1
        %s247 = scalar_select %p246, %s23, 1
        %s248 = smul.addr %s245, 2
        %s249 = sadd.s32 %s247, %s248
        %s250 = smul.addr %s249, 8
        %s251 = scalar_lea.vmem %s1, %s250
        %p252 = pneg %p79
        %p253 = pneg %p76
        %s254 = sand.u32 %s94, 1
        %s255 = scalar_lea.sflag [#allocation6], %s254
        %s256 = sand.u32 %s94, 1
        %s257 = smul.addr %s256, 4
        %s258 = scalar_lea.vmem [#allocation5], %s257
        %p259 = pneg %p107
        %p260 = pneg %p104
        %p261 = scmp.lt.s32.totalorder %s22, 1
        %s262 = scalar_select %p261, %s22, 1
        %s263 = scalar_lea.vmem %s3, %s262
        %p264 = pneg %p133
        %p265 = pneg %p130
        %p266 = pneg %p159
        %p267 = pneg %p156
        %p268 = scmp.lt.s32.totalorder %s22, 1
        %s269 = scalar_select %p268, %s22, 1
        %s270 = smul.addr %s269, 8
        %s271 = scalar_lea.vmem %s4, %s270
        %p272 = scmp.lt.s32.totalorder %s22, 1
        %s273 = scalar_select %p272, %s22, 1
        %s274 = smul.addr %s273, 8
        %s275 = scalar_lea.vmem %s0, %s274
        %p276 = scmp.lt.s32.totalorder %s22, 1
        %s277 = scalar_select %p276, %s22, 1
        %p278 = scmp.lt.s32.totalorder %s23, 1
        %s279 = scalar_select %p278, %s23, 1
        %s280 = smul.addr %s277, 2
        %s281 = sadd.s32 %s279, %s280
        %s282 = smul.addr %s281, 8
        %s283 = scalar_lea.vmem %s1, %s282
        %p284 = scmp.lt.s32.totalorder %s22, 1
        %s285 = scalar_select %p284, %s22, 1
        %s286 = scalar_lea.vmem %s3, %s285
        %p287 = scmp.lt.s32.totalorder %s22, 1
        %s288 = scalar_select %p287, %s22, 1
        %s289 = smul.addr %s288, 8
        %s290 = scalar_lea.vmem %s4, %s289
        %p292 = scmp.eq.s32.totalorder %s23, 0
        // Predicated region
        $region41: #{tpu_custom_call.1} parent=35 // pred_check
          %p293 = pneg %p292
        $region42: #{tpu_custom_call.1} parent=35 // pred_check_branch
          %295 = sbr.rel (%p293) target = $region44
        $region43: #{tpu_custom_call.1} parent=35 // pred_region
          %vm296 = vcmask 64512
          %297 = vst.msk [vmem:[#allocation2] sm:$0xff] %vm296, 0.0
          %298 = vst.msk [vmem:[#allocation3] sm:$0xff] %vm296, 0.0
          %299 = vst.msk [vmem:[#allocation4] sm:$0xff] %vm296, 0.0
        $region44: #{tpu_custom_call.1} parent=35 // pred_fallthru
          _
        %v300 = vld [vmem:[%s283] sm:$0xff]
        %v301 = vld [vmem:[%s233] sm:$0xf]
        %v302 = vsub.f32 0.0, %v300
        %v303 = vmax.f32 %v302, 0.0
        %v304 = vsub.f32 0.0, %v302
        %vm305 = vcmp.ne.f32.partialorder %v304, %v304
        %v306 = vadd.f32 %v302, 0.0
        %v307 = vand.u32 2147483647, %v304
        %v308 = vsub.f32 0.0, %v307
        %v309 = vmul.f32 %v308, 1.442695
        %v310 = vpow.pop %v309
        %v311 = vadd.f32 %v310, 1.0
        %v312 = vlog2.pop %v311
        %v313 = vmul.f32 %v312, 0.6931472
        %v314 = vmul.f32 -0.5, %v310
        %v315 = vadd.f32 %v314, 1.0
        %v316 = vmul.f32 %v315, %v310
        %v317 = vand.u32 2147483647, %v310
        %vm318 = vcmp.lt.f32.partialorder %v317, 0.0004427343
        %v319 = vsel %vm318, %v316, %v313
        %v320 = vadd.f32 %v303, %v319
        %v321 = vsel %vm305, %v306, %v320
        %v322 = vsub.f32 0.0, %v321
        %v323 = vmul.f32 %v322, 1.442695
        %v324 = vpow.pop %v323
        %v325 = vadd.f32 %v321, %v300
        %v326 = vsub.f32 1.0, %v324
        %v327 = vmul.f32 %v326, %v326
        %v328 = vmul.f32 %v327, %v321
        %v329 = vmul.f32 %v328, 0.25
        %v330 = vmul.f32 %v324, %v324
        %v331 = vmul.f32 %v330, %v325
        %v332 = vmul.f32 %v331, 0.75
        %v333 = vld [vmem:[#allocation2] sm:$0xff]
        %v334 = vpack.c.bf16 %v329, %v329
        %335 = vmatprep.subr.bf16.mxu0 0
        %336 = vmatpush1.bf16.xpose.msra.mxu0 %v301
        %337 = vmatprep.subr.bf16.mxu0 0
        %338 = vmatpush1.bf16.xpose.msra.mxu0 0
        %339 = vmatprep.subr.bf16.mxu0 0
        %340 = vmatpush1.bf16.xpose.msra.mxu0 0
        %341 = vmatprep.subr.bf16.mxu0 0
        %342 = vmatpush1.bf16.xpose.msra.mxu0 0
        %343 = vmatprep.subr.bf16.mxu0 0
        %344 = vmatpush1.bf16.xpose.msra.mxu0 0
        %345 = vmatprep.subr.bf16.mxu0 0
        %346 = vmatpush1.bf16.xpose.msra.mxu0 0
        %347 = vmatprep.subr.bf16.mxu0 0
        %348 = vmatpush1.bf16.xpose.msra.mxu0 0
        %349 = vmatprep.subr.bf16.mxu0 0
        %350 = vmatpush1.bf16.xpose.msra.mxu0 0
        %351 = vmatprep.subr.bf16.mxu0 0
        %352 = vmatpush1.bf16.xpose.msra.mxu0 0
        %353 = vmatprep.subr.bf16.mxu0 0
        %354 = vmatpush1.bf16.xpose.msra.mxu0 0
        %355 = vmatprep.subr.bf16.mxu0 0
        %356 = vmatpush1.bf16.xpose.msra.mxu0 0
        %357 = vmatprep.subr.bf16.mxu0 0
        %358 = vmatpush1.bf16.xpose.msra.mxu0 0
        %359 = vmatprep.subr.bf16.mxu0 0
        %360 = vmatpush1.bf16.xpose.msra.mxu0 0
        %361 = vmatprep.subr.bf16.mxu0 0
        %362 = vmatpush1.bf16.xpose.msra.mxu0 0
        %363 = vmatprep.subr.bf16.mxu0 0
        %364 = vmatpush1.bf16.xpose.msra.mxu0 0
        %365 = vmatprep.subr.bf16.mxu0 0
        %366 = vmatpush1.bf16.xpose.msra.mxu0 0
        %367 = vmatprep.mubr.bf16.mxu0 0
        %368 = vmatmul.mubr.bf16.gmra.mrb[0].mxu0 %v334
        %v369 = vpop.f32.mrb[0].mxu0
        %v370 = vadd.f32 0.0, %v369
        %v371 = vpop.f32.mrb[0].mxu0
        %v372 = vpop.f32.mrb[0].mxu0
        %v373 = vpop.f32.mrb[0].mxu0
        %374 = vdwg.mxu0
        %v375 = vadd.f32 %v333, %v370
        %vm376 = vcmask 64512
        %377 = vst.msk [vmem:[#allocation2] sm:$0xff] %vm376, %v375
        %v378 = vld [vmem:[#allocation3] sm:$0xff]
        %v379 = vpack.c.bf16 %v332, %v332
        %380 = vmatprep.subr.bf16.mxu0 0
        %381 = vmatpush1.bf16.xpose.msra.mxu0 %v301
        %382 = vmatprep.subr.bf16.mxu0 0
        %383 = vmatpush1.bf16.xpose.msra.mxu0 0
        %384 = vmatprep.subr.bf16.mxu0 0
        %385 = vmatpush1.bf16.xpose.msra.mxu0 0
        %386 = vmatprep.subr.bf16.mxu0 0
        %387 = vmatpush1.bf16.xpose.msra.mxu0 0
        %388 = vmatprep.subr.bf16.mxu0 0
        %389 = vmatpush1.bf16.xpose.msra.mxu0 0
        %390 = vmatprep.subr.bf16.mxu0 0
        %391 = vmatpush1.bf16.xpose.msra.mxu0 0
        %392 = vmatprep.subr.bf16.mxu0 0
        %393 = vmatpush1.bf16.xpose.msra.mxu0 0
        %394 = vmatprep.subr.bf16.mxu0 0
        %395 = vmatpush1.bf16.xpose.msra.mxu0 0
        %396 = vmatprep.subr.bf16.mxu0 0
        %397 = vmatpush1.bf16.xpose.msra.mxu0 0
        %398 = vmatprep.subr.bf16.mxu0 0
        %399 = vmatpush1.bf16.xpose.msra.mxu0 0
        %400 = vmatprep.subr.bf16.mxu0 0
        %401 = vmatpush1.bf16.xpose.msra.mxu0 0
        %402 = vmatprep.subr.bf16.mxu0 0
        %403 = vmatpush1.bf16.xpose.msra.mxu0 0
        %404 = vmatprep.subr.bf16.mxu0 0
        %405 = vmatpush1.bf16.xpose.msra.mxu0 0
        %406 = vmatprep.subr.bf16.mxu0 0
        %407 = vmatpush1.bf16.xpose.msra.mxu0 0
        %408 = vmatprep.subr.bf16.mxu0 0
        %409 = vmatpush1.bf16.xpose.msra.mxu0 0
        %410 = vmatprep.subr.bf16.mxu0 0
        %411 = vmatpush1.bf16.xpose.msra.mxu0 0
        %412 = vmatprep.mubr.bf16.mxu0 0
        %413 = vmatmul.mubr.bf16.gmra.mrb[0].mxu0 %v379
        %v414 = vpop.f32.mrb[0].mxu0
        %v415 = vadd.f32 0.0, %v414
        %v416 = vpop.f32.mrb[0].mxu0
        %v417 = vpop.f32.mrb[0].mxu0
        %v418 = vpop.f32.mrb[0].mxu0
        %419 = vdwg.mxu0
        %v420 = vadd.f32 %v378, %v415
        %421 = vst.msk [vmem:[#allocation3] sm:$0xff] %vm376, %v420
        %v422 = vld [vmem:[#allocation4] sm:$0xff]
        %v423 = vpack.c.bf16 %v324, %v324
        %424 = vmatprep.subr.bf16.mxu0 0
        %425 = vmatpush1.bf16.xpose.msra.mxu0 %v301
        %426 = vmatprep.subr.bf16.mxu0 0
        %427 = vmatpush1.bf16.xpose.msra.mxu0 0
        %428 = vmatprep.subr.bf16.mxu0 0
        %429 = vmatpush1.bf16.xpose.msra.mxu0 0
        %430 = vmatprep.subr.bf16.mxu0 0
        %431 = vmatpush1.bf16.xpose.msra.mxu0 0
        %432 = vmatprep.subr.bf16.mxu0 0
        %433 = vmatpush1.bf16.xpose.msra.mxu0 0
        %434 = vmatprep.subr.bf16.mxu0 0
        %435 = vmatpush1.bf16.xpose.msra.mxu0 0
        %436 = vmatprep.subr.bf16.mxu0 0
        %437 = vmatpush1.bf16.xpose.msra.mxu0 0
        %438 = vmatprep.subr.bf16.mxu0 0
        %439 = vmatpush1.bf16.xpose.msra.mxu0 0
        %440 = vmatprep.subr.bf16.mxu0 0
        %441 = vmatpush1.bf16.xpose.msra.mxu0 0
        %442 = vmatprep.subr.bf16.mxu0 0
        %443 = vmatpush1.bf16.xpose.msra.mxu0 0
        %444 = vmatprep.subr.bf16.mxu0 0
        %445 = vmatpush1.bf16.xpose.msra.mxu0 0
        %446 = vmatprep.subr.bf16.mxu0 0
        %447 = vmatpush1.bf16.xpose.msra.mxu0 0
        %448 = vmatprep.subr.bf16.mxu0 0
        %449 = vmatpush1.bf16.xpose.msra.mxu0 0
        %450 = vmatprep.subr.bf16.mxu0 0
        %451 = vmatpush1.bf16.xpose.msra.mxu0 0
        %452 = vmatprep.subr.bf16.mxu0 0
        %453 = vmatpush1.bf16.xpose.msra.mxu0 0
        %454 = vmatprep.subr.bf16.mxu0 0
        %455 = vmatpush1.bf16.xpose.msra.mxu0 0
        %456 = vmatprep.mubr.bf16.mxu0 0
        %457 = vmatmul.mubr.bf16.gmra.mrb[0].mxu0 %v423
        %v458 = vpop.f32.mrb[0].mxu0
        %v459 = vadd.f32 0.0, %v458
        %v460 = vpop.f32.mrb[0].mxu0
        %v461 = vpop.f32.mrb[0].mxu0
        %v462 = vpop.f32.mrb[0].mxu0
        %463 = vdwg.mxu0
        %v464 = vadd.f32 %v422, %v459
        %465 = vst.msk [vmem:[#allocation4] sm:$0xff] %vm376, %v464
        %p466 = scmp.eq.s32.totalorder %s23, 1
        // Predicated region
        $region45: #{tpu_custom_call.1} parent=35 // pred_check
          %p467 = pneg %p466
        $region46: #{tpu_custom_call.1} parent=35 // pred_check_branch
          %469 = sbr.rel (%p467) target = $region48
        $region47: #{tpu_custom_call.1} parent=35 // pred_region
          %v470 = vld [vmem:[#allocation2] sm:$0xff]
          %v471 = vld [vmem:[#allocation3] sm:$0xff]
          %v472 = vld [vmem:[#allocation4] sm:$0xff]
          %v473 = vsub.f32 %v470, %v471
          %475 = vset.pattern.permute.xlu0 6
          %476 = vperm.xlu0 %475, %v471
          %v477 = vpop.permute.xlu0 %476
          %v479 = vadd.f32 %v473, %v477
          %v480 = vmul.f32 %v479, 0.00390625
          %v481 = vld [vmem:[%s286] sm:$0x1]
          %483 = vset.pattern.permute.xlu0 6
          %484 = vperm.xlu0 %483, %v472
          %v485 = vpop.permute.xlu0 %484
          %v488 = vlaneseq
          %v489 = vshrl.u32 %v488, 7
          %v490 = vsub.s32 0, %v489
          %v491 = vrot.slane %v481, %v490
          %v493 = vadd.f32 %v485, %v491
          %v494 = vmul.f32 %v472, 2.0
          %v495 = vadd.f32 %v494, 1.0
          %v496 = vadd.f32 %v493, 1.0
          %v497 = vrcp.pop %v496
          %v498 = vmul.f32 %v495, %v497
          %v499 = vsub.f32 1.0, %v498
          %v500 = vld [vmem:[%s275] sm:$0xff]
          %vm501 = vcmask 56320
          %v502 = vsel %vm501, %v500, -inf
          %503 = vmax.xlane.f32.xlu0 %v502
          %v504 = vpop.xlane.xlu0 %503
          %v505 = vsub.f32 %v500, %v504
          %v506 = vmul.f32 %v505, 1.442695
          %v507 = vpow.pop %v506
          %v508 = vsel %vm501, %v507, 0.0
          %509 = vadd.xlane.f32.xlu0 %v508
          %v510 = vpop.xlane.xlu0 %509
          %v511 = vrcp.pop %v510
          %v512 = vmul.f32 %v507, %v511
          %v513 = vsub.f32 0.0, %v512
          %515 = vrot.lane.b32.xlu0 %v513, 127
          %v516 = vpop.permute.xlu0 %515
          %v518 = vadd.f32 %v480, %v516
          %v519 = vadd.f32 %v518, %v499
          %vm520 = vcmask 48128
          %521 = vst.msk [vmem:[%s290] sm:$0xff] %vm520, %v519
        $region48: #{tpu_custom_call.1} parent=35 // pred_fallthru
          _
        %p522 = scmp.lt.s32.totalorder %s22, 1
        %s523 = scalar_select %p522, %s22, 1
        %s524 = smul.addr %s523, 8
        %s525 = scalar_lea.vmem %s4, %s524
        // Predicated region
        $region49: #{tpu_custom_call.1} parent=35 // pred_check
          %p526 = pneg %p156
        $region50: #{tpu_custom_call.1} parent=35 // pred_check_branch
          %528 = sbr.rel (%p526) target = $region52
        $region51: #{tpu_custom_call.1} parent=35 // pred_region
          _
        $region52: #{tpu_custom_call.1} parent=35 // pred_fallthru
          _
      $region36: #{tpu_custom_call.1} parent=5 // pred_fallthru
        _
      %p529 = scmp.le.s32.totalorder 2, %s13
      // Predicated region
      $region53: #{tpu_custom_call.1} parent=5 // pred_check
        %p530 = pneg %p529
      $region54: #{tpu_custom_call.1} parent=5 // pred_check_branch
        %532 = sbr.rel (%p530) target = $region56
      $region55: #{tpu_custom_call.1} parent=5 // pred_region
        %s533 = ssub.s32 %s13, 2
        // Predicated region
        $region57: #{tpu_custom_call.1} parent=55 // pred_check
          %p534 = pneg %p162
        $region58: #{tpu_custom_call.1} parent=55 // pred_check_branch
          %536 = sbr.rel (%p534) target = $region60
        $region59: #{tpu_custom_call.1} parent=55 // pred_region
          %p537 = scmp.lt.s32.totalorder %s24, 1
          %s538 = scalar_select %p537, %s24, 1
          %s539 = smul.addr %s538, 8
          %s540 = scalar_lea.vmem %s4, %s539
        $region60: #{tpu_custom_call.1} parent=55 // pred_fallthru
          _
      $region56: #{tpu_custom_call.1} parent=5 // pred_fallthru
        _
    $region6: #{tpu_custom_call.1} parent=1 // loop_footer
      %s17 = sadd.s32 1, %s13
    $region7: #{tpu_custom_call.1} parent=1 // loop_footer_branch
      %12 = sbr.rel target = $region3
    $region8: #{tpu_custom_call.1} parent=1 // loop_exit
      _
    %541 = vsyncpa [#allocation6], 1
    %s542 = scalar_lea.sflag [#allocation6], 1
    %543 = vsyncpa %s542, 1

</llo_original>
